<compile_context>
chip_gen: v5e
topology: v5e:2x2
jax: 0.10.0
libtpu: 0.0.40
codegen_flags: <defaults>
</compile_context>

<pallas_src>
import jax
import jax.numpy as jnp
from jax.experimental import pallas as pl
from jax.experimental.pallas import tpu as pltpu

C_IN, C_OUT, KSZ, PAD = 6, 196, 15, 7
L = 128                       # input length implied by fc in_features 6272 = 196*32
POOL = 4
T = L // POOL                 # 32
CK = C_IN * KSZ               # 90
FLAT = C_OUT * T              # 6272
HID = 1024
NCLS = 6
K_TILE = 896                  # 6272 = 7 * 896, 896 = 7 * 128 (lane aligned)


def conv_relu_pool_kernel(p_ref, w_ref, b_ref, o_ref):
    # p_ref: (1, POOL*T, CK) rows in pool-offset-major order (row r = j*T + t)
    # w_ref: (CK, C_OUT)   b_ref: (1, C_OUT)   o_ref: (1, T, C_OUT)
    y = jnp.dot(p_ref[0], w_ref[...], preferred_element_type=jnp.float32)  # (128, 196)
    y = jnp.maximum(y + b_ref[...], 0.0)                 # Conv1d bias + ReLU
    # MaxPool1d(4, 4): rows j*T + t, j = 0..3 cover times t*4 + j.
    m = jnp.maximum(jnp.maximum(y[0 * T:1 * T], y[1 * T:2 * T]),
                    jnp.maximum(y[2 * T:3 * T], y[3 * T:4 * T]))
    o_ref[0] = m


def fc_kernel(x_ref, w1_ref, b1_ref, w2_ref, b2_ref, o_ref, acc_ref):
    # x_ref: (B, K_TILE) f32   w1_ref: (K_TILE, HID) bf16   b1_ref: (1, HID)
    # w2_ref: (HID, NCLS)      b2_ref: (1, NCLS)            o_ref: (B, NCLS)
    k = pl.program_id(0)

    @pl.when(k == 0)
    def _():
        acc_ref[...] = jnp.zeros_like(acc_ref)

    # bf16 MXU operands, f32 accumulation.
    acc_ref[...] += jnp.dot(x_ref[...].astype(jnp.bfloat16), w1_ref[...],
                            preferred_element_type=jnp.float32)

    @pl.when(k == pl.num_programs(0) - 1)
    def _():
        h = jnp.maximum(acc_ref[...] + b1_ref[...], 0.0)
        # TODO(synk): Dropout(0.5) is identity at inference time (eval mode).
        o_ref[...] = (jnp.dot(h, w2_ref[...],
                              preferred_element_type=jnp.float32)
                      + b2_ref[...]).astype(o_ref.dtype)


def uci_cnn_forward(x, params):
    wc, bc, w1, b1, w2, b2 = params
    B = x.shape[0]

    # ---- im2col glue (channels-last, pool-offset-major rows) ----
    xl = jnp.pad(x.transpose(0, 2, 1), ((0, 0), (PAD, PAD), (0, 0)))   # (B, L+14, C_IN)
    # row r = j*T + t  maps to time  t*POOL + j  (pool offset outermost)
    times = (jnp.arange(T)[None, :] * POOL + jnp.arange(POOL)[:, None]).reshape(-1)
    idx = times[:, None] + jnp.arange(KSZ)[None, :]                    # (128, 15)
    patches = xl[:, idx, :].reshape(B, POOL * T, CK)                   # (B, 128, 90)
    # weight columns in matching (k, ci) order
    w_mat = wc.transpose(2, 1, 0).reshape(CK, C_OUT)                   # (90, 196)

    pooled = pl.pallas_call(
        conv_relu_pool_kernel,
        out_shape=jax.ShapeDtypeStruct((B, T, C_OUT), jnp.float32),
        grid=(B,),
        in_specs=[
            pl.BlockSpec((1, POOL * T, CK), lambda b: (b, 0, 0)),
            pl.BlockSpec((CK, C_OUT), lambda b: (0, 0)),
            pl.BlockSpec((1, C_OUT), lambda b: (0, 0)),
        ],
        out_specs=pl.BlockSpec((1, T, C_OUT), lambda b: (b, 0, 0)),
        compiler_params=pltpu.CompilerParams(
            dimension_semantics=("parallel",)),
    )(patches, w_mat, bc.reshape(1, C_OUT))

    # One-time weight prep: permute w1 rows from PyTorch (C_OUT, T) flatten order
    # to the kernel's (T, C_OUT) order and store as bf16 (halves FC HBM bytes).
    w1_p = (w1.reshape(C_OUT, T, HID).transpose(1, 0, 2)
              .reshape(FLAT, HID).astype(jnp.bfloat16))
    flat = pooled.reshape(B, FLAT)                                     # contiguous: free

    out = pl.pallas_call(
        fc_kernel,
        out_shape=jax.ShapeDtypeStruct((B, NCLS), jnp.float32),
        grid=(FLAT // K_TILE,),
        in_specs=[
            pl.BlockSpec((B, K_TILE), lambda k: (0, k)),
            pl.BlockSpec((K_TILE, HID), lambda k: (k, 0)),
            pl.BlockSpec((1, HID), lambda k: (0, 0)),
            pl.BlockSpec((HID, NCLS), lambda k: (0, 0)),
            pl.BlockSpec((1, NCLS), lambda k: (0, 0)),
        ],
        out_specs=pl.BlockSpec((B, NCLS), lambda k: (0, 0)),
        scratch_shapes=[pltpu.VMEM((B, HID), jnp.float32)],
        compiler_params=pltpu.CompilerParams(
            dimension_semantics=("arbitrary",)),
    )(flat, w1_p, b1.reshape(1, HID), w2, b2.reshape(1, NCLS))
    return out


def reference(x, params):
    """Pure-JAX reference matching the PyTorch forward (eval mode), f32."""
    wc, bc, w1, b1, w2, b2 = params
    B = x.shape[0]
    y = jax.lax.conv_general_dilated(
        x, wc, window_strides=(1,), padding=[(PAD, PAD)],
        dimension_numbers=("NCH", "OIH", "NCH"))
    y = jnp.maximum(y + bc[None, :, None], 0.0)
    y = y.reshape(B, C_OUT, T, POOL).max(axis=-1)
    f = y.reshape(B, FLAT)
    h = jnp.maximum(f @ w1 + b1, 0.0)
    return h @ w2 + b2


if __name__ == "__main__":
    key = jax.random.PRNGKey(0)
    ks = jax.random.split(key, 7)
    B = 2
    x = jax.random.normal(ks[0], (B, C_IN, L), jnp.float32)

    # Deterministic synthetic parameters (PyTorch shapes: Conv1d W (196,6,15),
    # Linear1 W (1024,6272) stored transposed, Linear2 W (6,1024) transposed).
    wc = 0.05 * jax.random.normal(ks[1], (C_OUT, C_IN, KSZ), jnp.float32)
    bc = 0.05 * jax.random.normal(ks[2], (C_OUT,), jnp.float32)
    w1 = 0.02 * jax.random.normal(ks[3], (FLAT, HID), jnp.float32)
    b1 = 0.02 * jax.random.normal(ks[4], (HID,), jnp.float32)
    w2 = 0.05 * jax.random.normal(ks[5], (HID, NCLS), jnp.float32)
    b2 = 0.05 * jax.random.normal(ks[6], (NCLS,), jnp.float32)
    params = (wc, bc, w1, b1, w2, b2)

    out = jax.block_until_ready(uci_cnn_forward(x, params))
    ref = jax.block_until_ready(reference(x, params))

    assert out.shape == (B, NCLS), out.shape
    assert jnp.allclose(out, ref, rtol=5e-2, atol=5e-2), (out, ref)
    print("KERNEL_OK")
</pallas_src>

<mosaic_0001>
module attributes {stable_mosaic.version = 11 : i64} {
  func.func @conv_relu_pool_kernel(%arg0: i32, %arg1: memref<1x128x90xf32, #tpu.memory_space<vmem>>, %arg2: memref<90x196xf32, #tpu.memory_space<vmem>>, %arg3: memref<1x196xf32, #tpu.memory_space<vmem>>, %arg4: memref<1x32x196xf32, #tpu.memory_space<vmem>>) attributes {dimension_semantics = [#tpu.dimension_semantics<parallel>], iteration_bounds = array<i64: 2>, scalar_prefetch = 0 : i64, scratch_operands = 0 : i64, tpu.core_type = #tpu.core_type<tc>, window_params = [{transform_indices = @transform_0, window_bounds = array<i64: 1, 128, 90>}, {pipeline_mode = #tpu.pipeline_mode<synchronous>, transform_indices = @transform_1, window_bounds = array<i64: 90, 196>}, {pipeline_mode = #tpu.pipeline_mode<synchronous>, transform_indices = @transform_2, window_bounds = array<i64: 1, 196>}, {transform_indices = @transform_3, window_bounds = array<i64: 1, 32, 196>}]} {
    %c0 = arith.constant 0 : index
    %c0_0 = arith.constant 0 : index
    %c0_1 = arith.constant 0 : index
    %0 = vector.load %arg1[%c0, %c0_0, %c0_1] : memref<1x128x90xf32, #tpu.memory_space<vmem>>, vector<1x128x90xf32>
    %1 = vector.shape_cast %0 : vector<1x128x90xf32> to vector<128x90xf32>
    %c0_2 = arith.constant 0 : index
    %c0_3 = arith.constant 0 : index
    %2 = vector.load %arg2[%c0_2, %c0_3] : memref<90x196xf32, #tpu.memory_space<vmem>>, vector<90x196xf32>
    %cst = arith.constant dense<0.000000e+00> : vector<128x196xf32>
    %3 = tpu.matmul %1, %2, %cst {dimension_numbers = #tpu.dot_dimension_numbers<[1], [0], [0], [1], [0, 0, 1, 1], [], []>} : vector<128x90xf32>, vector<90x196xf32>, vector<128x196xf32> -> vector<128x196xf32>
    %c0_4 = arith.constant 0 : index
    %c0_5 = arith.constant 0 : index
    %4 = vector.load %arg3[%c0_4, %c0_5] : memref<1x196xf32, #tpu.memory_space<vmem>>, vector<1x196xf32>
    %5 = vector.broadcast %4 : vector<1x196xf32> to vector<128x196xf32>
    %6 = arith.addf %3, %5 : vector<128x196xf32>
    %cst_6 = arith.constant 0.000000e+00 : f32
    %7 = vector.broadcast %cst_6 : f32 to vector<128x196xf32>
    %8 = arith.maximumf %6, %7 : vector<128x196xf32>
    %9 = vector.extract_strided_slice %8 {offsets = [0, 0], sizes = [32, 196], strides = [1, 1]} : vector<128x196xf32> to vector<32x196xf32>
    %10 = vector.extract_strided_slice %8 {offsets = [32, 0], sizes = [32, 196], strides = [1, 1]} : vector<128x196xf32> to vector<32x196xf32>
    %11 = arith.maximumf %9, %10 : vector<32x196xf32>
    %12 = vector.extract_strided_slice %8 {offsets = [64, 0], sizes = [32, 196], strides = [1, 1]} : vector<128x196xf32> to vector<32x196xf32>
    %13 = vector.extract_strided_slice %8 {offsets = [96, 0], sizes = [32, 196], strides = [1, 1]} : vector<128x196xf32> to vector<32x196xf32>
    %14 = arith.maximumf %12, %13 : vector<32x196xf32>
    %15 = arith.maximumf %11, %14 : vector<32x196xf32>
    %c0_7 = arith.constant 0 : index
    %c0_8 = arith.constant 0 : index
    %c0_9 = arith.constant 0 : index
    %16 = vector.load %arg4[%c0_7, %c0_8, %c0_9] : memref<1x32x196xf32, #tpu.memory_space<vmem>>, vector<1x32x196xf32>
    %17 = vector.shape_cast %16 : vector<1x32x196xf32> to vector<32x196xf32>
    %18 = vector.shape_cast %15 : vector<32x196xf32> to vector<1x32x196xf32>
    tpu.vector_store %arg4[%c0_7, %c0_8, %c0_9], %18 {strides = array<i32>} : memref<1x32x196xf32, #tpu.memory_space<vmem>>, vector<1x32x196xf32>,
    return
  }
  func.func @transform_0(%arg0: i32) -> (i32, i32, i32) {
    %c0_i32 = arith.constant 0 : i32
    %c0_i32_0 = arith.constant 0 : i32
    %c0_i32_1 = arith.constant 0 : i32
    return %arg0, %c0_i32, %c0_i32_0 : i32, i32, i32
  }
  func.func @transform_1(%arg0: i32) -> (i32, i32) {
    %c0_i32 = arith.constant 0 : i32
    %c0_i32_0 = arith.constant 0 : i32
    %c0_i32_1 = arith.constant 0 : i32
    return %c0_i32, %c0_i32_0 : i32, i32
  }
  func.func @transform_2(%arg0: i32) -> (i32, i32) {
    %c0_i32 = arith.constant 0 : i32
    %c0_i32_0 = arith.constant 0 : i32
    %c0_i32_1 = arith.constant 0 : i32
    return %c0_i32, %c0_i32_0 : i32, i32
  }
  func.func @transform_3(%arg0: i32) -> (i32, i32, i32) {
    %c0_i32 = arith.constant 0 : i32
    %c0_i32_0 = arith.constant 0 : i32
    %c0_i32_1 = arith.constant 0 : i32
    return %arg0, %c0_i32, %c0_i32_0 : i32, i32, i32
  }
}

</mosaic_0001>

<llo_original>
// kernel: tpu_custom_call.1
$region0: #{tpu_custom_call.1}
  #allocation0 [shape = 'u32[]', space=smem, size = 0x4, offset = 0x4, fixed_abs, tag = 'smem constant byte address 0x4 - core index']
  #allocation1 [shape = 'u32[72,128]{1,0:T(1,128)}', space=vmem, size = 0x9000, scoped, tag = 'internal scratch']
  %s0 = inlined_call_operand.vmem [shape: f32[2,128,90], index: 0, kind: input, shape index: {}]
  %s1 = inlined_call_operand.vmem [shape: f32[90,196], index: 1, kind: input, shape index: {}]
  %s2 = inlined_call_operand.vmem [shape: f32[1,196], index: 2, kind: input, shape index: {}]
  %s3 = inlined_call_operand.hbm [shape: f32[2,32,196], index: 3, kind: output, shape index: {}]
  %s4 = sld [smem:[#allocation0]]
  $region45: #{tpu_custom_call.1} parent=0
    _
  %s6 = ssub.s32 1, %s4
  %s7 = scalar_select 0, %s6, %s4
  $region1: #{tpu_custom_call.1} parent=0
    #allocation2 [shape = 'u8[65536]{0}', space=vmem, size = 0x10000, scoped, tag = 'output window, operand 0']
    #allocation3 [shape = 's32[2]{0}', space=sflag, size = 0x8, scoped, tag = 'scoped memory for tpu_custom_call.1']
    %8 = vsyncpa [#allocation3], 0
    %s9 = scalar_lea.sflag [#allocation3], 1
    %10 = vsyncpa %s9, 0
    loop: start=0, step=1, limit=4
    $region2: #{tpu_custom_call.1} parent=1 // loop_pre_header
      _
    $region3: #{tpu_custom_call.1} parent=1 // loop_header
      %s12 = sphi 0, %s16
      %p13 = scmp.ge.s32.totalorder %s12, 4
      %s22 = sphi 0, %s24
      %s25 = sphi 0, %s22
      %s26 = sphi 0, %s25
      %s42 = sphi 0, %s26
      %s46 = sphi 0, %s46
      %s48 = sphi 0, %s46
      %s49 = sphi 0, %s48
      %s63 = sphi 0, %s49
      %s67 = sphi 0, %s67
      %s69 = sphi 0, %s67
      %s70 = sphi 0, %s69
      %s84 = sphi 0, %s70
      %s90 = sphi 0, %s92
      %s93 = sphi 0, %s90
      %s94 = sphi 0, %s93
      %s110 = sphi 0, %s94
    $region4: #{tpu_custom_call.1} parent=1 // loop_header_branch
      %15 = sbr.rel (%p13) target = $region8
    $region5: #{tpu_custom_call.1} parent=1 // loop_body
      %s17 = ssub.s32 %s12, 1
      %s18 = ssub.s32 %s12, 2
      %s19 = sadd.s32 %s12, 1
      %s20 = ssub.s32 %s12, %s19
      %p21 = scmp.eq.s32.totalorder %s20, 0
      %s23 = sadd.s32 %s22, 1
      %s24 = scalar_select %p21, %s22, %s23
      %p27 = pneg %p21
      %p28 = scmp.eq.s32.totalorder %s12, 1
      %p29 = por %p27, %p28
      %p30 = scmp.ne.s32.totalorder %s22, %s25
      %p31 = scmp.eq.s32.totalorder %s12, 0
      %p32 = por %p30, %p31
      %p33 = scmp.ne.s32.totalorder %s22, %s25
      %p34 = scmp.eq.s32.totalorder %s17, 1
      %p35 = por %p33, %p34
      %p36 = scmp.ne.s32.totalorder %s25, %s26
      %p37 = scmp.eq.s32.totalorder %s17, 0
      %p38 = por %p36, %p37
      %p39 = scmp.ne.s32.totalorder %s25, %s26
      %p40 = scmp.eq.s32.totalorder %s18, 1
      %p41 = por %p39, %p40
      %p43 = scmp.ne.s32.totalorder %s26, %s42
      %p44 = scmp.eq.s32.totalorder %s18, 0
      %p45 = por %p43, %p44
      %s47 = sadd.s32 %s46, 1
      %p50 = scmp.eq.s32.totalorder %s12, 1
      %p51 = scmp.ne.s32.totalorder %s46, %s48
      %p52 = scmp.eq.s32.totalorder %s12, 0
      %p53 = por %p51, %p52
      %p54 = scmp.ne.s32.totalorder %s46, %s48
      %p55 = scmp.eq.s32.totalorder %s17, 1
      %p56 = por %p54, %p55
      %p57 = scmp.ne.s32.totalorder %s48, %s49
      %p58 = scmp.eq.s32.totalorder %s17, 0
      %p59 = por %p57, %p58
      %p60 = scmp.ne.s32.totalorder %s48, %s49
      %p61 = scmp.eq.s32.totalorder %s18, 1
      %p62 = por %p60, %p61
      %p64 = scmp.ne.s32.totalorder %s49, %s63
      %p65 = scmp.eq.s32.totalorder %s18, 0
      %p66 = por %p64, %p65
      %s68 = sadd.s32 %s67, 1
      %p71 = scmp.eq.s32.totalorder %s12, 1
      %p72 = scmp.ne.s32.totalorder %s67, %s69
      %p73 = scmp.eq.s32.totalorder %s12, 0
      %p74 = por %p72, %p73
      %p75 = scmp.ne.s32.totalorder %s67, %s69
      %p76 = scmp.eq.s32.totalorder %s17, 1
      %p77 = por %p75, %p76
      %p78 = scmp.ne.s32.totalorder %s69, %s70
      %p79 = scmp.eq.s32.totalorder %s17, 0
      %p80 = por %p78, %p79
      %p81 = scmp.ne.s32.totalorder %s69, %s70
      %p82 = scmp.eq.s32.totalorder %s18, 1
      %p83 = por %p81, %p82
      %p85 = scmp.ne.s32.totalorder %s70, %s84
      %p86 = scmp.eq.s32.totalorder %s18, 0
      %p87 = por %p85, %p86
      %s88 = ssub.s32 %s12, %s19
      %p89 = scmp.eq.s32.totalorder %s88, 0
      %s91 = sadd.s32 %s90, 1
      %s92 = scalar_select %p89, %s90, %s91
      %p95 = pneg %p89
      %p96 = scmp.eq.s32.totalorder %s12, 1
      %p97 = por %p95, %p96
      %p98 = scmp.ne.s32.totalorder %s90, %s93
      %p99 = scmp.eq.s32.totalorder %s12, 0
      %p100 = por %p98, %p99
      %p101 = scmp.ne.s32.totalorder %s90, %s93
      %p102 = scmp.eq.s32.totalorder %s17, 1
      %p103 = por %p101, %p102
      %p104 = scmp.ne.s32.totalorder %s93, %s94
      %p105 = scmp.eq.s32.totalorder %s17, 0
      %p106 = por %p104, %p105
      %p107 = scmp.ne.s32.totalorder %s93, %s94
      %p108 = scmp.eq.s32.totalorder %s18, 1
      %p109 = por %p107, %p108
      %p111 = scmp.ne.s32.totalorder %s94, %s110
      %p112 = scmp.eq.s32.totalorder %s18, 0
      %p113 = por %p111, %p112
      %p114 = scmp.le.s32.totalorder 1, %s12
      %p115 = scmp.lt.s32.totalorder %s12, 3
      %p116 = pnand %p114, %p115
      %p117 = pneg %p116
      // Predicated region
      $region9: #{tpu_custom_call.1} parent=5 // pred_check
        _
      $region10: #{tpu_custom_call.1} parent=5 // pred_check_branch
        %119 = sbr.rel (%p116) target = $region12
      $region11: #{tpu_custom_call.1} parent=5 // pred_region
        %s120 = ssub.s32 %s12, 1
        // Predicated region
        $region13: #{tpu_custom_call.1} parent=11 // pred_check
          %p121 = pneg %p59
        $region14: #{tpu_custom_call.1} parent=11 // pred_check_branch
          %123 = sbr.rel (%p121) target = $region16
        $region15: #{tpu_custom_call.1} parent=11 // pred_region
          _
        $region16: #{tpu_custom_call.1} parent=11 // pred_fallthru
          _
        // Predicated region
        $region17: #{tpu_custom_call.1} parent=11 // pred_check
          %p124 = pneg %p80
        $region18: #{tpu_custom_call.1} parent=11 // pred_check_branch
          %126 = sbr.rel (%p124) target = $region20
        $region19: #{tpu_custom_call.1} parent=11 // pred_region
          _
        $region20: #{tpu_custom_call.1} parent=11 // pred_fallthru
          _
      $region12: #{tpu_custom_call.1} parent=5 // pred_fallthru
        _
      %p127 = scmp.lt.s32.totalorder %s12, 2
      // Predicated region
      $region21: #{tpu_custom_call.1} parent=5 // pred_check
        %p128 = pneg %p127
      $region22: #{tpu_custom_call.1} parent=5 // pred_check_branch
        %130 = sbr.rel (%p128) target = $region24
      $region23: #{tpu_custom_call.1} parent=5 // pred_region
        // Predicated region
        $region25: #{tpu_custom_call.1} parent=23 // pred_check
          %p131 = pneg %p32
        $region26: #{tpu_custom_call.1} parent=23 // pred_check_branch
          %133 = sbr.rel (%p131) target = $region28
        $region27: #{tpu_custom_call.1} parent=23 // pred_region
          %p134 = scmp.lt.s32.totalorder %s12, 1
          %s135 = scalar_select %p134, %s12, 1
          %s136 = smul.addr %s135, 16
          %s137 = smul.addr %s136, 8
          %s138 = scalar_lea.vmem %s0, %s137
        $region28: #{tpu_custom_call.1} parent=23 // pred_fallthru
          _
      $region24: #{tpu_custom_call.1} parent=5 // pred_fallthru
        _
      %p139 = scmp.le.s32.totalorder 1, %s12
      %p140 = scmp.lt.s32.totalorder %s12, 3
      %p141 = pnand %p139, %p140
      %p142 = pneg %p141
      // Predicated region
      $region29: #{tpu_custom_call.1} parent=5 // pred_check
        _
      $region30: #{tpu_custom_call.1} parent=5 // pred_check_branch
        %144 = sbr.rel (%p141) target = $region32
      $region31: #{tpu_custom_call.1} parent=5 // pred_region
        %s145 = ssub.s32 %s12, 1
        %p146 = scmp.lt.s32.totalorder %s17, 1
        %s147 = scalar_select %p146, %s17, 1
        %s148 = smul.addr %s147, 16
        %s149 = smul.addr %s148, 8
        %s150 = scalar_lea.vmem %s0, %s149
        %p151 = pneg %p38
        %p152 = pneg %p35
        %p153 = pneg %p59
        %p154 = pneg %p56
        %p155 = pneg %p80
        %p156 = pneg %p77
        %p157 = pneg %p106
        %p158 = pneg %p103
        %s159 = sand.u32 %s93, 1
        %s160 = scalar_lea.sflag [#allocation3], %s159
        %s161 = sand.u32 %s93, 1
        %s162 = smul.addr %s161, 64
        %s163 = scalar_lea.vmem [#allocation2], %s162
        %p164 = scmp.lt.s32.totalorder %s17, 1
        %s165 = scalar_select %p164, %s17, 1
        %s166 = smul.addr %s165, 16
        %s167 = smul.addr %s166, 8
        %s168 = scalar_lea.vmem %s0, %s167
        %v169 = vld [vmem:[%s168] sm:$0xff]
        %v170 = vld [vmem:[%s168 + $0x8] sm:$0xff]
        %v171 = vld [vmem:[%s168 + $0x10] sm:$0xff]
        %v172 = vld [vmem:[%s168 + $0x18] sm:$0xff]
        %v173 = vld [vmem:[%s168 + $0x20] sm:$0xff]
        %v174 = vld [vmem:[%s168 + $0x28] sm:$0xff]
        %v175 = vld [vmem:[%s168 + $0x30] sm:$0xff]
        %v176 = vld [vmem:[%s168 + $0x38] sm:$0xff]
        %v177 = vld [vmem:[%s168 + $0x40] sm:$0xff]
        %v178 = vld [vmem:[%s168 + $0x48] sm:$0xff]
        %v179 = vld [vmem:[%s168 + $0x50] sm:$0xff]
        %v180 = vld [vmem:[%s168 + $0x58] sm:$0xff]
        %v181 = vld [vmem:[%s168 + $0x60] sm:$0xff]
        %v182 = vld [vmem:[%s168 + $0x68] sm:$0xff]
        %v183 = vld [vmem:[%s168 + $0x70] sm:$0xff]
        %v184 = vld [vmem:[%s168 + $0x78] sm:$0xff]
        %v185 = vld [vmem:[%s1] sm:$0xff]
        %v186 = vld [vmem:[%s1 + $0x8] sm:$0xff]
        %v187 = vld [vmem:[%s1 + $0x10] sm:$0xff]
        %v188 = vld [vmem:[%s1 + $0x18] sm:$0xff]
        %v189 = vld [vmem:[%s1 + $0x20] sm:$0xff]
        %v190 = vld [vmem:[%s1 + $0x28] sm:$0xff]
        %v191 = vld [vmem:[%s1 + $0x30] sm:$0xff]
        %v192 = vld [vmem:[%s1 + $0x38] sm:$0xff]
        %v193 = vld [vmem:[%s1 + $0x40] sm:$0xff]
        %v194 = vld [vmem:[%s1 + $0x48] sm:$0xff]
        %v195 = vld [vmem:[%s1 + $0x50] sm:$0xff]
        %v196 = vld [vmem:[%s1 + $0x58] sm:$0xff]
        %v197 = vld [vmem:[%s1 + $0x60] sm:$0xff]
        %v198 = vld [vmem:[%s1 + $0x68] sm:$0xff]
        %v199 = vld [vmem:[%s1 + $0x70] sm:$0xff]
        %v200 = vld [vmem:[%s1 + $0x78] sm:$0xff]
        %v201 = vld [vmem:[%s1 + $0x80] sm:$0xff]
        %v202 = vld [vmem:[%s1 + $0x88] sm:$0xff]
        %v203 = vld [vmem:[%s1 + $0x90] sm:$0xff]
        %v204 = vld [vmem:[%s1 + $0x98] sm:$0xff]
        %v205 = vld [vmem:[%s1 + $0xa0] sm:$0xff]
        %v206 = vld [vmem:[%s1 + $0xa8] sm:$0xff]
        %v207 = vld [vmem:[%s1 + $0xb0] sm:$0x3]
        %v208 = vld [vmem:[%s1 + $0xb8] sm:$0x3]
        %v209 = vld [vmem:[%s2] sm:$0x3]
        %v211 = vperm.slane %v209, 0
        %v212 = vperm.slane %v209, 1
        %vm215 = vcmask 736256
        %v217 = vsel %vm215, %v169, 0
        %v220 = vsel %vm215, %v170, 0
        %v223 = vsel %vm215, %v171, 0
        %v226 = vsel %vm215, %v172, 0
        %v229 = vsel %vm215, %v173, 0
        %v232 = vsel %vm215, %v174, 0
        %v235 = vsel %vm215, %v175, 0
        %v238 = vsel %vm215, %v176, 0
        %v241 = vsel %vm215, %v177, 0
        %v244 = vsel %vm215, %v178, 0
        %v247 = vsel %vm215, %v179, 0
        %v250 = vsel %vm215, %v180, 0
        %v253 = vsel %vm215, %v181, 0
        %v256 = vsel %vm215, %v182, 0
        %v259 = vsel %vm215, %v183, 0
        %v262 = vsel %vm215, %v184, 0
        %vm264 = vcmask 1041408
        %v266 = vsel %vm264, %v207, 0
        %v269 = vsel %vm264, %v208, 0
        %271 = vmatpush.msra.mxu0 0.0
        %272 = vmatpush.msra.mxu0 0.0
        %273 = vmatpush.msra.mxu0 0.0
        %274 = vmatpush.msra.mxu0 0.0
        %275 = vmatpush.msra.mxu0 %v266
        %276 = vmatpush.msra.mxu0 %v205
        %277 = vmatpush.msra.mxu0 %v203
        %278 = vmatpush.msra.mxu0 %v201
        %279 = vmatpush.msra.mxu0 %v199
        %280 = vmatpush.msra.mxu0 %v197
        %281 = vmatpush.msra.mxu0 %v195
        %282 = vmatpush.msra.mxu0 %v193
        %283 = vmatpush.msra.mxu0 %v191
        %284 = vmatpush.msra.mxu0 %v189
        %285 = vmatpush.msra.mxu0 %v187
        %286 = vmatpush.msra.mxu0 %v185
        %287 = vmatmul.f32.gmra.mxu0 %v217
        %v288 = vpop.f32.mrf.mxu0
        %v289 = vadd.f32 %v211, %v288
        %290 = vmatmul.f32.gmra.mxu0 %v220
        %v291 = vpop.f32.mrf.mxu0
        %v292 = vadd.f32 %v211, %v291
        %293 = vmatmul.f32.gmra.mxu0 %v223
        %v294 = vpop.f32.mrf.mxu0
        %v295 = vadd.f32 %v211, %v294
        %296 = vmatmul.f32.gmra.mxu0 %v226
        %v297 = vpop.f32.mrf.mxu0
        %v298 = vadd.f32 %v211, %v297
        %299 = vmatmul.f32.gmra.mxu0 %v229
        %v300 = vpop.f32.mrf.mxu0
        %v301 = vadd.f32 %v211, %v300
        %302 = vmatmul.f32.gmra.mxu0 %v232
        %v303 = vpop.f32.mrf.mxu0
        %v304 = vadd.f32 %v211, %v303
        %305 = vmatmul.f32.gmra.mxu0 %v235
        %v306 = vpop.f32.mrf.mxu0
        %v307 = vadd.f32 %v211, %v306
        %308 = vmatmul.f32.gmra.mxu0 %v238
        %v309 = vpop.f32.mrf.mxu0
        %v310 = vadd.f32 %v211, %v309
        %311 = vmatmul.f32.gmra.mxu0 %v241
        %v312 = vpop.f32.mrf.mxu0
        %v313 = vadd.f32 %v211, %v312
        %314 = vmatmul.f32.gmra.mxu0 %v244
        %v315 = vpop.f32.mrf.mxu0
        %v316 = vadd.f32 %v211, %v315
        %317 = vmatmul.f32.gmra.mxu0 %v247
        %v318 = vpop.f32.mrf.mxu0
        %v319 = vadd.f32 %v211, %v318
        %320 = vmatmul.f32.gmra.mxu0 %v250
        %v321 = vpop.f32.mrf.mxu0
        %v322 = vadd.f32 %v211, %v321
        %323 = vmatmul.f32.gmra.mxu0 %v253
        %v324 = vpop.f32.mrf.mxu0
        %v325 = vadd.f32 %v211, %v324
        %326 = vmatmul.f32.gmra.mxu0 %v256
        %v327 = vpop.f32.mrf.mxu0
        %v328 = vadd.f32 %v211, %v327
        %329 = vmatmul.f32.gmra.mxu0 %v259
        %v330 = vpop.f32.mrf.mxu0
        %v331 = vadd.f32 %v211, %v330
        %332 = vmatmul.f32.gmra.mxu0 %v262
        %v333 = vpop.f32.mrf.mxu0
        %v334 = vadd.f32 %v211, %v333
        %335 = vdwg.mxu0
        %336 = vmatpush.msra.mxu0 0.0
        %337 = vmatpush.msra.mxu0 0.0
        %338 = vmatpush.msra.mxu0 0.0
        %339 = vmatpush.msra.mxu0 0.0
        %340 = vmatpush.msra.mxu0 %v269
        %341 = vmatpush.msra.mxu0 %v206
        %342 = vmatpush.msra.mxu0 %v204
        %343 = vmatpush.msra.mxu0 %v202
        %344 = vmatpush.msra.mxu0 %v200
        %345 = vmatpush.msra.mxu0 %v198
        %346 = vmatpush.msra.mxu0 %v196
        %347 = vmatpush.msra.mxu0 %v194
        %348 = vmatpush.msra.mxu0 %v192
        %349 = vmatpush.msra.mxu0 %v190
        %350 = vmatpush.msra.mxu0 %v188
        %351 = vmatpush.msra.mxu0 %v186
        %352 = vmatmul.f32.gmra.mxu0 %v217
        %v353 = vpop.f32.mrf.mxu0
        %v354 = vadd.f32 %v212, %v353
        %355 = vmatmul.f32.gmra.mxu0 %v220
        %v356 = vpop.f32.mrf.mxu0
        %v357 = vadd.f32 %v212, %v356
        %358 = vmatmul.f32.gmra.mxu0 %v223
        %v359 = vpop.f32.mrf.mxu0
        %v360 = vadd.f32 %v212, %v359
        %361 = vmatmul.f32.gmra.mxu0 %v226
        %v362 = vpop.f32.mrf.mxu0
        %v363 = vadd.f32 %v212, %v362
        %364 = vmatmul.f32.gmra.mxu0 %v229
        %v365 = vpop.f32.mrf.mxu0
        %v366 = vadd.f32 %v212, %v365
        %367 = vmatmul.f32.gmra.mxu0 %v232
        %v368 = vpop.f32.mrf.mxu0
        %v369 = vadd.f32 %v212, %v368
        %370 = vmatmul.f32.gmra.mxu0 %v235
        %v371 = vpop.f32.mrf.mxu0
        %v372 = vadd.f32 %v212, %v371
        %373 = vmatmul.f32.gmra.mxu0 %v238
        %v374 = vpop.f32.mrf.mxu0
        %v375 = vadd.f32 %v212, %v374
        %376 = vmatmul.f32.gmra.mxu0 %v241
        %v377 = vpop.f32.mrf.mxu0
        %v378 = vadd.f32 %v212, %v377
        %379 = vmatmul.f32.gmra.mxu0 %v244
        %v380 = vpop.f32.mrf.mxu0
        %v381 = vadd.f32 %v212, %v380
        %382 = vmatmul.f32.gmra.mxu0 %v247
        %v383 = vpop.f32.mrf.mxu0
        %v384 = vadd.f32 %v212, %v383
        %385 = vmatmul.f32.gmra.mxu0 %v250
        %v386 = vpop.f32.mrf.mxu0
        %v387 = vadd.f32 %v212, %v386
        %388 = vmatmul.f32.gmra.mxu0 %v253
        %v389 = vpop.f32.mrf.mxu0
        %v390 = vadd.f32 %v212, %v389
        %391 = vmatmul.f32.gmra.mxu0 %v256
        %v392 = vpop.f32.mrf.mxu0
        %v393 = vadd.f32 %v212, %v392
        %394 = vmatmul.f32.gmra.mxu0 %v259
        %v395 = vpop.f32.mrf.mxu0
        %v396 = vadd.f32 %v212, %v395
        %397 = vmatmul.f32.gmra.mxu0 %v262
        %v398 = vpop.f32.mrf.mxu0
        %v399 = vadd.f32 %v212, %v398
        %400 = vdwg.mxu0
        %v401 = vmax.f32 %v289, 0.0
        %v402 = vmax.f32 %v354, 0.0
        %v403 = vmax.f32 %v292, 0.0
        %v404 = vmax.f32 %v357, 0.0
        %v405 = vmax.f32 %v295, 0.0
        %v406 = vmax.f32 %v360, 0.0
        %v407 = vmax.f32 %v298, 0.0
        %v408 = vmax.f32 %v363, 0.0
        %v409 = vmax.f32 %v301, 0.0
        %v410 = vmax.f32 %v366, 0.0
        %v411 = vmax.f32 %v304, 0.0
        %v412 = vmax.f32 %v369, 0.0
        %v413 = vmax.f32 %v307, 0.0
        %v414 = vmax.f32 %v372, 0.0
        %v415 = vmax.f32 %v310, 0.0
        %v416 = vmax.f32 %v375, 0.0
        %v417 = vmax.f32 %v313, 0.0
        %v418 = vmax.f32 %v378, 0.0
        %v419 = vmax.f32 %v316, 0.0
        %v420 = vmax.f32 %v381, 0.0
        %v421 = vmax.f32 %v319, 0.0
        %v422 = vmax.f32 %v384, 0.0
        %v423 = vmax.f32 %v322, 0.0
        %v424 = vmax.f32 %v387, 0.0
        %v425 = vmax.f32 %v325, 0.0
        %v426 = vmax.f32 %v390, 0.0
        %v427 = vmax.f32 %v328, 0.0
        %v428 = vmax.f32 %v393, 0.0
        %v429 = vmax.f32 %v331, 0.0
        %v430 = vmax.f32 %v396, 0.0
        %v431 = vmax.f32 %v334, 0.0
        %v432 = vmax.f32 %v399, 0.0
        %v433 = vmax.f32 %v401, %v409
        %v434 = vmax.f32 %v402, %v410
        %v435 = vmax.f32 %v403, %v411
        %v436 = vmax.f32 %v404, %v412
        %v437 = vmax.f32 %v405, %v413
        %v438 = vmax.f32 %v406, %v414
        %v439 = vmax.f32 %v407, %v415
        %v440 = vmax.f32 %v408, %v416
        %v441 = vmax.f32 %v417, %v425
        %v442 = vmax.f32 %v418, %v426
        %v443 = vmax.f32 %v419, %v427
        %v444 = vmax.f32 %v420, %v428
        %v445 = vmax.f32 %v421, %v429
        %v446 = vmax.f32 %v422, %v430
        %v447 = vmax.f32 %v423, %v431
        %v448 = vmax.f32 %v424, %v432
        %v449 = vmax.f32 %v433, %v441
        %v450 = vmax.f32 %v434, %v442
        %v451 = vmax.f32 %v435, %v443
        %v452 = vmax.f32 %v436, %v444
        %v453 = vmax.f32 %v437, %v445
        %v454 = vmax.f32 %v438, %v446
        %v455 = vmax.f32 %v439, %v447
        %v456 = vmax.f32 %v440, %v448
        %457 = vst [vmem:[%s163] sm:$0xff] %v449
        %vm458 = vcmask 556032
        %459 = vst.msk [vmem:[%s163 + $0x8] sm:$0xff] %vm458, %v450
        %460 = vst [vmem:[%s163 + $0x10] sm:$0xff] %v451
        %461 = vst.msk [vmem:[%s163 + $0x18] sm:$0xff] %vm458, %v452
        %462 = vst [vmem:[%s163 + $0x20] sm:$0xff] %v453
        %463 = vst.msk [vmem:[%s163 + $0x28] sm:$0xff] %vm458, %v454
        %464 = vst [vmem:[%s163 + $0x30] sm:$0xff] %v455
        %465 = vst.msk [vmem:[%s163 + $0x38] sm:$0xff] %vm458, %v456
        %s466 = sand.u32 %s93, 1
        %s467 = scalar_lea.sflag [#allocation3], %s466
        %s468 = sand.u32 %s93, 1
        %s469 = smul.addr %s468, 64
        %s470 = scalar_lea.vmem [#allocation2], %s469
        // Predicated region
        $region33: #{tpu_custom_call.1} parent=31 // pred_check
          %p471 = pneg %p103
        $region34: #{tpu_custom_call.1} parent=31 // pred_check_branch
          %473 = sbr.rel (%p471) target = $region36
        $region35: #{tpu_custom_call.1} parent=31 // pred_region
          %475 = vsyncadd %s467, 0
          %s476 = smul.addr %s17, 8
          %s477 = smul.addr %s476, 8
          %s478 = scalar_lea.hbm %s3, %s477
          %s479 = sshll.u32 %s470, 4
          %s480 = int_to_ptr.vmem [resolvable:$true] %s479
          %s481 = sshll.u32 %s478, 4
          %s482 = int_to_ptr.hbm [resolvable:$true] %s481
          %487 = dma.vmem_to_hbm [thread:$0]  %s480, 1024, %s482, %s467, 256, 256, 16
        $region36: #{tpu_custom_call.1} parent=31 // pred_fallthru
          _
      $region32: #{tpu_custom_call.1} parent=5 // pred_fallthru
        _
      %p488 = scmp.le.s32.totalorder 2, %s12
      // Predicated region
      $region37: #{tpu_custom_call.1} parent=5 // pred_check
        %p489 = pneg %p488
      $region38: #{tpu_custom_call.1} parent=5 // pred_check_branch
        %491 = sbr.rel (%p489) target = $region40
      $region39: #{tpu_custom_call.1} parent=5 // pred_region
        %s492 = ssub.s32 %s12, 2
        // Predicated region
        $region41: #{tpu_custom_call.1} parent=39 // pred_check
          %p493 = pneg %p109
        $region42: #{tpu_custom_call.1} parent=39 // pred_check_branch
          %495 = sbr.rel (%p493) target = $region44
        $region43: #{tpu_custom_call.1} parent=39 // pred_region
          %s496 = sand.u32 %s94, 1
          %s497 = scalar_lea.sflag [#allocation3], %s496
          %s498 = sand.u32 %s94, 1
          %s499 = smul.addr %s498, 64
          %s500 = scalar_lea.vmem [#allocation2], %s499
          %502 = dma.done %s497, 1024
        $region44: #{tpu_custom_call.1} parent=39 // pred_fallthru
          _
      $region40: #{tpu_custom_call.1} parent=5 // pred_fallthru
        _
    $region6: #{tpu_custom_call.1} parent=1 // loop_footer
      %s16 = sadd.s32 1, %s12
    $region7: #{tpu_custom_call.1} parent=1 // loop_footer_branch
      %11 = sbr.rel target = $region3
    $region8: #{tpu_custom_call.1} parent=1 // loop_exit
      _
    %503 = vsyncpa [#allocation3], 1
    %s504 = scalar_lea.sflag [#allocation3], 1
    %505 = vsyncpa %s504, 1

</llo_original>
